<compile_context>
chip_gen: v6e
topology: v6e:2x2x1
jax: 0.10.0
libtpu: 0.0.40
codegen_flags: <defaults>
</compile_context>

<pallas_src>
import functools

import numpy as np
import jax
import jax.numpy as jnp
from jax import lax
from jax.experimental import pallas as pl
from jax.experimental.pallas import tpu as pltpu


_MXU_PRECISION = lax.Precision.HIGHEST  # keep full f32 accuracy on the MXU


# ----------------------------------------------------------------------------
# Generation-aware sizing helpers
# ----------------------------------------------------------------------------
def _vmem_capacity_bytes():
    """Physical VMEM per core; conservative (v7x-sized) if the query fails."""
    try:
        return int(pltpu.get_tpu_info().vmem_capacity_bytes)
    except Exception:
        return 64 << 20


def _budgets():
    """(max_block_bytes, vmem_limit_bytes) gated on the TPU generation."""
    cap = _vmem_capacity_bytes()
    if cap >= (100 << 20):            # v5e / v6e: 128 MiB VMEM per core
        return 4 << 20, 64 << 20
    return 2 << 20, 40 << 20          # v7x: 64 MiB VMEM per core, 2 TCs


def _choose_planes_per_block(n_planes, plane_bytes, max_block_bytes,
                             sublane_align):
    """Planes per grid step: biggest block inside the VMEM budget; split into
    >= 2 (ideally >= 8) grid steps only when there is enough total data for
    megacore / DMA pipelining to matter; 8-sublane aligned when the plane axis
    is the second-minor dim (flattened layout).  Ragged last block is OK."""
    total = n_planes * plane_bytes
    cap = max(1, int(max_block_bytes // max(plane_bytes, 1)))
    if total >= 8 * max_block_bytes:
        cap = min(cap, -(-n_planes // 8))          # aim for >= 8 steps
    elif total >= (2 << 20) and n_planes >= 2:
        cap = min(cap, -(-n_planes // 2))          # give both v7x TCs work
    cap = min(cap, n_planes)
    if sublane_align and cap < n_planes:
        cap = min(n_planes, max(8, (cap // 8) * 8))
    return max(1, cap)


# ----------------------------------------------------------------------------
# Banded blur matrices (built once per call, outside the kernel)
# ----------------------------------------------------------------------------
def _box_blur_matrix(n, k):
    """A = (B @ B) / k^2 with B[i,j] = 1 iff |i-j| <= k//2.
    Left-multiplying (resp. right-multiplying) by A applies two zero-padded
    1-D k-tap box blurs along that axis, with the intermediate zero-padded,
    exactly like the reference's two sequential conv2d calls.  Symmetric."""
    p = k // 2
    idx = jnp.arange(n)
    b = (jnp.abs(idx[:, None] - idx[None, :]) <= p).astype(jnp.float32)
    return jnp.dot(b, b, precision=_MXU_PRECISION) / float(k * k)


# ----------------------------------------------------------------------------
# Kernels
# ----------------------------------------------------------------------------
def _tophat_kron_kernel(x_ref, m_ref, o_ref):
    """Small-plane path: x block is (planes, H*W) lane-dense, m = kron(A_H, A_W).
    Both blurs and both spatial axes fuse into one MXU matmul per block."""
    x = x_ref[...].astype(jnp.float32)
    opened = jnp.dot(x, m_ref[...],
                     preferred_element_type=jnp.float32,
                     precision=_MXU_PRECISION)
    o_ref[...] = (x - opened).astype(o_ref.dtype)


def _tophat_separable_kernel(x_ref, ah_ref, aw_ref, o_ref):
    """Large-plane path: x block is (planes, H, W); two batched banded matmuls
    (W axis then H axis), no transposes, no roll/mask sweeps."""
    x = x_ref[...].astype(jnp.float32)
    p_blk = x.shape[0]
    # Broadcast the shared matrices across the plane (batch) dim once per
    # block so both contractions are plain batched MXU matmuls.
    a_w = jnp.broadcast_to(aw_ref[...], (p_blk,) + aw_ref.shape)
    a_h = jnp.broadcast_to(ah_ref[...], (p_blk,) + ah_ref.shape)
    # W-axis double blur: opened_w[p,h,w] = sum_k x[p,h,k] * A_W[k,w]
    y = jnp.einsum("phk,pkw->phw", x, a_w,
                   preferred_element_type=jnp.float32,
                   precision=_MXU_PRECISION)
    # H-axis double blur: opened[p,h,w] = sum_k A_H[h,k] * y[p,k,w]
    opened = jnp.einsum("phk,pkw->phw", a_h, y,
                        preferred_element_type=jnp.float32,
                        precision=_MXU_PRECISION)
    o_ref[...] = (x - opened).astype(o_ref.dtype)


# ----------------------------------------------------------------------------
# Wrapper
# ----------------------------------------------------------------------------
def tophat_transform(images, kernel_size=3):
    """images: (B, C, H, W), NCHW.  Returns images - morphological_opening(images)."""
    if kernel_size % 2 != 1:
        raise ValueError(
            "kernel_size must be odd: even sizes change the spatial shape in "
            "the PyTorch conv2d reference (padding=k//2).")
    B, C, H, W = images.shape
    k = kernel_size
    n_planes = B * C
    max_block_bytes, vmem_limit = _budgets()

    a_h = _box_blur_matrix(H, k)      # (H, H)
    a_w = _box_blur_matrix(W, k)      # (W, W)

    compiler_params = pltpu.CompilerParams(
        dimension_semantics=("parallel",),
        vmem_limit_bytes=vmem_limit,
    )

    if H * W <= 1024:
        # ---- small planes: fully fused, lane-dense Kronecker matmul -------
        hw = H * W
        m = jnp.kron(a_h, a_w)                      # (H*W, H*W) <= 4 MiB
        planes = images.reshape(n_planes, hw)       # free contiguous reshape
        p_blk = _choose_planes_per_block(n_planes, hw * 4, max_block_bytes,
                                         sublane_align=True)
        grid = (-(-n_planes // p_blk),)
        out = pl.pallas_call(
            _tophat_kron_kernel,
            out_shape=jax.ShapeDtypeStruct((n_planes, hw), images.dtype),
            grid_spec=pltpu.PrefetchScalarGridSpec(
                num_scalar_prefetch=0,
                grid=grid,
                in_specs=[
                    pl.BlockSpec((p_blk, hw), lambda i: (i, 0)),
                    pl.BlockSpec((hw, hw), lambda i: (0, 0)),   # resident
                ],
                out_specs=pl.BlockSpec((p_blk, hw), lambda i: (i, 0)),
            ),
            compiler_params=compiler_params,
        )(planes, m)
        return out.reshape(B, C, H, W)

    # ---- larger planes: separable banded matmuls over whole planes --------
    # TODO(synk): for planes so large that a single f32 (H, W) plane plus its
    # ~3x matmul intermediates overflow the VMEM budget, an H-tiled variant
    # contracting row-blocks of A_H is needed; not required at these sizes.
    planes = images.reshape(n_planes, H, W)
    p_blk = _choose_planes_per_block(n_planes, H * W * 4, max_block_bytes,
                                     sublane_align=False)
    grid = (-(-n_planes // p_blk),)
    out = pl.pallas_call(
        _tophat_separable_kernel,
        out_shape=jax.ShapeDtypeStruct((n_planes, H, W), images.dtype),
        grid_spec=pltpu.PrefetchScalarGridSpec(
            num_scalar_prefetch=0,
            grid=grid,
            in_specs=[
                pl.BlockSpec((p_blk, H, W), lambda i: (i, 0, 0)),
                pl.BlockSpec((H, H), lambda i: (0, 0)),         # resident
                pl.BlockSpec((W, W), lambda i: (0, 0)),         # resident
            ],
            out_specs=pl.BlockSpec((p_blk, H, W), lambda i: (i, 0, 0)),
        ),
        compiler_params=compiler_params,
    )(planes, a_h, a_w)
    return out.reshape(B, C, H, W)


# ----------------------------------------------------------------------------
# Independent float64 reference (mirrors the PyTorch module)
# ----------------------------------------------------------------------------
def _tophat_reference_np(x, kernel_size=3):
    k = kernel_size
    p = k // 2
    a = np.asarray(x, dtype=np.float64)

    def box_blur(v):
        _, _, Hn, Wn = v.shape
        pad = np.pad(v, ((0, 0), (0, 0), (p, p), (p, p)))
        out = np.zeros_like(v)
        for di in range(k):
            for dj in range(k):
                out += pad[:, :, di:di + Hn, dj:dj + Wn]
        return out / float(k * k)

    return a - box_blur(box_blur(a))


if __name__ == "__main__":
    key = jax.random.PRNGKey(0)
    B, C, H, W = 2, 4, 16, 16
    x = jax.random.normal(key, (B, C, H, W), dtype=jnp.float32)

    fn = jax.jit(functools.partial(tophat_transform, kernel_size=3))
    out = jax.block_until_ready(fn(x))

    ref = _tophat_reference_np(np.asarray(x), kernel_size=3)
    assert out.shape == (B, C, H, W)
    err = float(np.max(np.abs(np.asarray(out, dtype=np.float64) - ref)))
    assert err < 2e-5, f"mismatch vs reference: max abs err {err}"

    print("KERNEL_OK")
</pallas_src>

<mosaic_0001>
module attributes {stable_mosaic.version = 11 : i64} {
  func.func @_tophat_kron_kernel(%arg0: i32, %arg1: memref<8x256xf32, #tpu.memory_space<vmem>>, %arg2: memref<256x256xf32, #tpu.memory_space<vmem>>, %arg3: memref<8x256xf32, #tpu.memory_space<vmem>>) attributes {dimension_semantics = [#tpu.dimension_semantics<parallel>], iteration_bounds = array<i64: 1>, scalar_prefetch = 0 : i64, scratch_operands = 0 : i64, tpu.core_type = #tpu.core_type<tc>, window_params = [{transform_indices = @transform_0, window_bounds = array<i64: 8, 256>}, {pipeline_mode = #tpu.pipeline_mode<synchronous>, transform_indices = @transform_1, window_bounds = array<i64: 256, 256>}, {transform_indices = @transform_2, window_bounds = array<i64: 8, 256>}]} {
    %c0 = arith.constant 0 : index
    %c0_0 = arith.constant 0 : index
    %0 = vector.load %arg1[%c0, %c0_0] : memref<8x256xf32, #tpu.memory_space<vmem>>, vector<8x256xf32>
    %c0_1 = arith.constant 0 : index
    %c0_2 = arith.constant 0 : index
    %1 = vector.load %arg2[%c0_1, %c0_2] : memref<256x256xf32, #tpu.memory_space<vmem>>, vector<256x256xf32>
    %cst = arith.constant dense<0.000000e+00> : vector<8x256xf32>
    %2 = tpu.matmul %0, %1, %cst {dimension_numbers = #tpu.dot_dimension_numbers<[1], [0], [0], [1], [0, 0, 1, 1], [], []>, precision = #tpu.contract_precision<fp32>} : vector<8x256xf32>, vector<256x256xf32>, vector<8x256xf32> -> vector<8x256xf32>
    %3 = arith.subf %0, %2 : vector<8x256xf32>
    %c0_3 = arith.constant 0 : index
    %c0_4 = arith.constant 0 : index
    %4 = vector.load %arg3[%c0_3, %c0_4] : memref<8x256xf32, #tpu.memory_space<vmem>>, vector<8x256xf32>
    tpu.vector_store %arg3[%c0_3, %c0_4], %3 {strides = array<i32>} : memref<8x256xf32, #tpu.memory_space<vmem>>, vector<8x256xf32>,
    return
  }
  func.func @transform_0(%arg0: i32) -> (i32, i32) {
    %c0_i32 = arith.constant 0 : i32
    %c0_i32_0 = arith.constant 0 : i32
    return %arg0, %c0_i32 : i32, i32
  }
  func.func @transform_1(%arg0: i32) -> (i32, i32) {
    %c0_i32 = arith.constant 0 : i32
    %c0_i32_0 = arith.constant 0 : i32
    %c0_i32_1 = arith.constant 0 : i32
    return %c0_i32, %c0_i32_0 : i32, i32
  }
  func.func @transform_2(%arg0: i32) -> (i32, i32) {
    %c0_i32 = arith.constant 0 : i32
    %c0_i32_0 = arith.constant 0 : i32
    return %arg0, %c0_i32 : i32, i32
  }
}

</mosaic_0001>

<llo_original>
// kernel: tophat_transform.1
$region0: #{tophat_transform.1}
  #allocation0 [shape = 'u32[]', space=smem, size = 0x4, offset = 0x4, fixed_abs, tag = 'smem constant byte address 0x4 - core index']
  #allocation1 [shape = 'u32[144,128]{1,0:T(1,128)}', space=vmem, size = 0x12000, scoped, tag = 'internal scratch']
  %s0 = inlined_call_operand.vmem [shape: f32[8,256], index: 0, kind: input, shape index: {}]
  %s1 = inlined_call_operand.vmem [shape: f32[256,256], index: 1, kind: input, shape index: {}]
  %s2 = inlined_call_operand.vmem [shape: f32[8,256], index: 2, kind: output, shape index: {}]
  %s3 = sld [smem:[#allocation0]]
  $region18: #{tophat_transform.1} parent=0
    _
  %s5 = ssub.s32 1, %s3
  %s6 = scalar_select 0, %s5, %s3
  // Predicated region
  $region2: #{tophat_transform.1} parent=0 // pred_check
    _
  $region3: #{tophat_transform.1} parent=0 // pred_check_branch
    %8 = sbr.rel (0) target = $region5
  $region4: #{tophat_transform.1} parent=0 // pred_region
    _
  $region5: #{tophat_transform.1} parent=0 // pred_fallthru
    _
  // Predicated region
  $region6: #{tophat_transform.1} parent=0 // pred_check
    _
  $region7: #{tophat_transform.1} parent=0 // pred_check_branch
    %10 = sbr.rel (0) target = $region9
  $region8: #{tophat_transform.1} parent=0 // pred_region
    _
  $region9: #{tophat_transform.1} parent=0 // pred_fallthru
    _
  %v11 = vld [vmem:[%s0] sm:$0xff]
  %v12 = vld [vmem:[%s0 + $0x8] sm:$0xff]
  %v13 = vld [vmem:[%s1] sm:$0xff]
  %v14 = vld [vmem:[%s1 + $0x8] sm:$0xff]
  %v15 = vld [vmem:[%s1 + $0x10] sm:$0xff]
  %v16 = vld [vmem:[%s1 + $0x18] sm:$0xff]
  %v17 = vld [vmem:[%s1 + $0x20] sm:$0xff]
  %v18 = vld [vmem:[%s1 + $0x28] sm:$0xff]
  %v19 = vld [vmem:[%s1 + $0x30] sm:$0xff]
  %v20 = vld [vmem:[%s1 + $0x38] sm:$0xff]
  %v21 = vld [vmem:[%s1 + $0x40] sm:$0xff]
  %v22 = vld [vmem:[%s1 + $0x48] sm:$0xff]
  %v23 = vld [vmem:[%s1 + $0x50] sm:$0xff]
  %v24 = vld [vmem:[%s1 + $0x58] sm:$0xff]
  %v25 = vld [vmem:[%s1 + $0x60] sm:$0xff]
  %v26 = vld [vmem:[%s1 + $0x68] sm:$0xff]
  %v27 = vld [vmem:[%s1 + $0x70] sm:$0xff]
  %v28 = vld [vmem:[%s1 + $0x78] sm:$0xff]
  %v29 = vld [vmem:[%s1 + $0x80] sm:$0xff]
  %v30 = vld [vmem:[%s1 + $0x88] sm:$0xff]
  %v31 = vld [vmem:[%s1 + $0x90] sm:$0xff]
  %v32 = vld [vmem:[%s1 + $0x98] sm:$0xff]
  %v33 = vld [vmem:[%s1 + $0xa0] sm:$0xff]
  %v34 = vld [vmem:[%s1 + $0xa8] sm:$0xff]
  %v35 = vld [vmem:[%s1 + $0xb0] sm:$0xff]
  %v36 = vld [vmem:[%s1 + $0xb8] sm:$0xff]
  %v37 = vld [vmem:[%s1 + $0xc0] sm:$0xff]
  %v38 = vld [vmem:[%s1 + $0xc8] sm:$0xff]
  %v39 = vld [vmem:[%s1 + $0xd0] sm:$0xff]
  %v40 = vld [vmem:[%s1 + $0xd8] sm:$0xff]
  %v41 = vld [vmem:[%s1 + $0xe0] sm:$0xff]
  %v42 = vld [vmem:[%s1 + $0xe8] sm:$0xff]
  %v43 = vld [vmem:[%s1 + $0xf0] sm:$0xff]
  %v44 = vld [vmem:[%s1 + $0xf8] sm:$0xff]
  %v45 = vld [vmem:[%s1 + $0x100] sm:$0xff]
  %v46 = vld [vmem:[%s1 + $0x108] sm:$0xff]
  %v47 = vld [vmem:[%s1 + $0x110] sm:$0xff]
  %v48 = vld [vmem:[%s1 + $0x118] sm:$0xff]
  %v49 = vld [vmem:[%s1 + $0x120] sm:$0xff]
  %v50 = vld [vmem:[%s1 + $0x128] sm:$0xff]
  %v51 = vld [vmem:[%s1 + $0x130] sm:$0xff]
  %v52 = vld [vmem:[%s1 + $0x138] sm:$0xff]
  %v53 = vld [vmem:[%s1 + $0x140] sm:$0xff]
  %v54 = vld [vmem:[%s1 + $0x148] sm:$0xff]
  %v55 = vld [vmem:[%s1 + $0x150] sm:$0xff]
  %v56 = vld [vmem:[%s1 + $0x158] sm:$0xff]
  %v57 = vld [vmem:[%s1 + $0x160] sm:$0xff]
  %v58 = vld [vmem:[%s1 + $0x168] sm:$0xff]
  %v59 = vld [vmem:[%s1 + $0x170] sm:$0xff]
  %v60 = vld [vmem:[%s1 + $0x178] sm:$0xff]
  %v61 = vld [vmem:[%s1 + $0x180] sm:$0xff]
  %v62 = vld [vmem:[%s1 + $0x188] sm:$0xff]
  %v63 = vld [vmem:[%s1 + $0x190] sm:$0xff]
  %v64 = vld [vmem:[%s1 + $0x198] sm:$0xff]
  %v65 = vld [vmem:[%s1 + $0x1a0] sm:$0xff]
  %v66 = vld [vmem:[%s1 + $0x1a8] sm:$0xff]
  %v67 = vld [vmem:[%s1 + $0x1b0] sm:$0xff]
  %v68 = vld [vmem:[%s1 + $0x1b8] sm:$0xff]
  %v69 = vld [vmem:[%s1 + $0x1c0] sm:$0xff]
  %v70 = vld [vmem:[%s1 + $0x1c8] sm:$0xff]
  %v71 = vld [vmem:[%s1 + $0x1d0] sm:$0xff]
  %v72 = vld [vmem:[%s1 + $0x1d8] sm:$0xff]
  %v73 = vld [vmem:[%s1 + $0x1e0] sm:$0xff]
  %v74 = vld [vmem:[%s1 + $0x1e8] sm:$0xff]
  %v75 = vld [vmem:[%s1 + $0x1f0] sm:$0xff]
  %v76 = vld [vmem:[%s1 + $0x1f8] sm:$0xff]
  %v77 = vand.u32 %v44, 4294901760
  %78 = vmatprep.subr.mxu0 %v77
  %v79 = vand.u32 %v43, 4294901760
  %80 = vmatpush1.msra.mxu0 %v79
  %v81 = vand.u32 %v42, 4294901760
  %82 = vmatprep.subr.mxu0 %v81
  %v83 = vand.u32 %v41, 4294901760
  %84 = vmatpush1.msra.mxu0 %v83
  %v85 = vand.u32 %v40, 4294901760
  %86 = vmatprep.subr.mxu0 %v85
  %v87 = vand.u32 %v39, 4294901760
  %88 = vmatpush1.msra.mxu0 %v87
  %v89 = vand.u32 %v38, 4294901760
  %90 = vmatprep.subr.mxu0 %v89
  %v91 = vand.u32 %v37, 4294901760
  %92 = vmatpush1.msra.mxu0 %v91
  %v93 = vand.u32 %v36, 4294901760
  %94 = vmatprep.subr.mxu0 %v93
  %v95 = vand.u32 %v35, 4294901760
  %96 = vmatpush1.msra.mxu0 %v95
  %v97 = vand.u32 %v34, 4294901760
  %98 = vmatprep.subr.mxu0 %v97
  %v99 = vand.u32 %v33, 4294901760
  %100 = vmatpush1.msra.mxu0 %v99
  %v101 = vand.u32 %v32, 4294901760
  %102 = vmatprep.subr.mxu0 %v101
  %v103 = vand.u32 %v31, 4294901760
  %104 = vmatpush1.msra.mxu0 %v103
  %v105 = vand.u32 %v30, 4294901760
  %106 = vmatprep.subr.mxu0 %v105
  %v107 = vand.u32 %v29, 4294901760
  %108 = vmatpush1.msra.mxu0 %v107
  %v109 = vand.u32 %v28, 4294901760
  %110 = vmatprep.subr.mxu0 %v109
  %v111 = vand.u32 %v27, 4294901760
  %112 = vmatpush1.msra.mxu0 %v111
  %v113 = vand.u32 %v26, 4294901760
  %114 = vmatprep.subr.mxu0 %v113
  %v115 = vand.u32 %v25, 4294901760
  %116 = vmatpush1.msra.mxu0 %v115
  %v117 = vand.u32 %v24, 4294901760
  %118 = vmatprep.subr.mxu0 %v117
  %v119 = vand.u32 %v23, 4294901760
  %120 = vmatpush1.msra.mxu0 %v119
  %v121 = vand.u32 %v22, 4294901760
  %122 = vmatprep.subr.mxu0 %v121
  %v123 = vand.u32 %v21, 4294901760
  %124 = vmatpush1.msra.mxu0 %v123
  %v125 = vand.u32 %v20, 4294901760
  %126 = vmatprep.subr.mxu0 %v125
  %v127 = vand.u32 %v19, 4294901760
  %128 = vmatpush1.msra.mxu0 %v127
  %v129 = vand.u32 %v18, 4294901760
  %130 = vmatprep.subr.mxu0 %v129
  %v131 = vand.u32 %v17, 4294901760
  %132 = vmatpush1.msra.mxu0 %v131
  %v133 = vand.u32 %v16, 4294901760
  %134 = vmatprep.subr.mxu0 %v133
  %v135 = vand.u32 %v15, 4294901760
  %136 = vmatpush1.msra.mxu0 %v135
  %v137 = vand.u32 %v14, 4294901760
  %138 = vmatprep.subr.mxu0 %v137
  %v139 = vand.u32 %v13, 4294901760
  %140 = vmatpush1.msra.mxu0 %v139
  %v141 = vand.u32 %v76, 4294901760
  %142 = vmatprep.subr.mxu0 %v141
  %v143 = vand.u32 %v75, 4294901760
  %144 = vmatpush2.msra.mxu0 %v143
  %v145 = vand.u32 %v74, 4294901760
  %146 = vmatprep.subr.mxu0 %v145
  %v147 = vand.u32 %v73, 4294901760
  %148 = vmatpush2.msra.mxu0 %v147
  %v149 = vand.u32 %v72, 4294901760
  %150 = vmatprep.subr.mxu0 %v149
  %v151 = vand.u32 %v71, 4294901760
  %152 = vmatpush2.msra.mxu0 %v151
  %v153 = vand.u32 %v70, 4294901760
  %154 = vmatprep.subr.mxu0 %v153
  %v155 = vand.u32 %v69, 4294901760
  %156 = vmatpush2.msra.mxu0 %v155
  %v157 = vand.u32 %v68, 4294901760
  %158 = vmatprep.subr.mxu0 %v157
  %v159 = vand.u32 %v67, 4294901760
  %160 = vmatpush2.msra.mxu0 %v159
  %v161 = vand.u32 %v66, 4294901760
  %162 = vmatprep.subr.mxu0 %v161
  %v163 = vand.u32 %v65, 4294901760
  %164 = vmatpush2.msra.mxu0 %v163
  %v165 = vand.u32 %v64, 4294901760
  %166 = vmatprep.subr.mxu0 %v165
  %v167 = vand.u32 %v63, 4294901760
  %168 = vmatpush2.msra.mxu0 %v167
  %v169 = vand.u32 %v62, 4294901760
  %170 = vmatprep.subr.mxu0 %v169
  %v171 = vand.u32 %v61, 4294901760
  %172 = vmatpush2.msra.mxu0 %v171
  %v173 = vand.u32 %v60, 4294901760
  %174 = vmatprep.subr.mxu0 %v173
  %v175 = vand.u32 %v59, 4294901760
  %176 = vmatpush2.msra.mxu0 %v175
  %v177 = vand.u32 %v58, 4294901760
  %178 = vmatprep.subr.mxu0 %v177
  %v179 = vand.u32 %v57, 4294901760
  %180 = vmatpush2.msra.mxu0 %v179
  %v181 = vand.u32 %v56, 4294901760
  %182 = vmatprep.subr.mxu0 %v181
  %v183 = vand.u32 %v55, 4294901760
  %184 = vmatpush2.msra.mxu0 %v183
  %v185 = vand.u32 %v54, 4294901760
  %186 = vmatprep.subr.mxu0 %v185
  %v187 = vand.u32 %v53, 4294901760
  %188 = vmatpush2.msra.mxu0 %v187
  %v189 = vand.u32 %v52, 4294901760
  %190 = vmatprep.subr.mxu0 %v189
  %v191 = vand.u32 %v51, 4294901760
  %192 = vmatpush2.msra.mxu0 %v191
  %v193 = vand.u32 %v50, 4294901760
  %194 = vmatprep.subr.mxu0 %v193
  %v195 = vand.u32 %v49, 4294901760
  %196 = vmatpush2.msra.mxu0 %v195
  %v197 = vand.u32 %v48, 4294901760
  %198 = vmatprep.subr.mxu0 %v197
  %v199 = vand.u32 %v47, 4294901760
  %200 = vmatpush2.msra.mxu0 %v199
  %v201 = vand.u32 %v46, 4294901760
  %202 = vmatprep.subr.mxu0 %v201
  %v203 = vand.u32 %v45, 4294901760
  %204 = vmatpush2.msra.mxu0 %v203
  %v205 = vand.u32 %v12, 4294901760
  %v206 = vsub.f32 %v12, %v205
  %v207 = vand.u32 %v206, 4294901760
  %v208 = vsub.f32 %v206, %v207
  %v209 = vand.u32 %v208, 4294901760
  %210 = vmatprep.mubr.f32.mxu0 %v209
  %v211 = vand.u32 %v11, 4294901760
  %v212 = vsub.f32 %v11, %v211
  %v213 = vand.u32 %v212, 4294901760
  %v214 = vsub.f32 %v212, %v213
  %v215 = vand.u32 %v214, 4294901760
  %216 = vmatmul.mubr.f32.gmra.mxu0 %v215
  %v217 = vpop.f32.mrf.mxu0
  %v218 = vadd.f32 0.0, %v217
  %v219 = vpop.f32.mrf.mxu0
  %v220 = vadd.f32 0.0, %v219
  %221 = vdwg.mxu0
  %v222 = vand.u32 %v44, 4294901760
  %v223 = vsub.f32 %v44, %v222
  %v224 = vand.u32 %v223, 4294901760
  %v225 = vsub.f32 %v223, %v224
  %v226 = vand.u32 %v225, 4294901760
  %227 = vmatprep.subr.mxu0 %v226
  %v228 = vand.u32 %v43, 4294901760
  %v229 = vsub.f32 %v43, %v228
  %v230 = vand.u32 %v229, 4294901760
  %v231 = vsub.f32 %v229, %v230
  %v232 = vand.u32 %v231, 4294901760
  %233 = vmatpush1.msra.mxu0 %v232
  %v234 = vand.u32 %v42, 4294901760
  %v235 = vsub.f32 %v42, %v234
  %v236 = vand.u32 %v235, 4294901760
  %v237 = vsub.f32 %v235, %v236
  %v238 = vand.u32 %v237, 4294901760
  %239 = vmatprep.subr.mxu0 %v238
  %v240 = vand.u32 %v41, 4294901760
  %v241 = vsub.f32 %v41, %v240
  %v242 = vand.u32 %v241, 4294901760
  %v243 = vsub.f32 %v241, %v242
  %v244 = vand.u32 %v243, 4294901760
  %245 = vmatpush1.msra.mxu0 %v244
  %v246 = vand.u32 %v40, 4294901760
  %v247 = vsub.f32 %v40, %v246
  %v248 = vand.u32 %v247, 4294901760
  %v249 = vsub.f32 %v247, %v248
  %v250 = vand.u32 %v249, 4294901760
  %251 = vmatprep.subr.mxu0 %v250
  %v252 = vand.u32 %v39, 4294901760
  %v253 = vsub.f32 %v39, %v252
  %v254 = vand.u32 %v253, 4294901760
  %v255 = vsub.f32 %v253, %v254
  %v256 = vand.u32 %v255, 4294901760
  %257 = vmatpush1.msra.mxu0 %v256
  %v258 = vand.u32 %v38, 4294901760
  %v259 = vsub.f32 %v38, %v258
  %v260 = vand.u32 %v259, 4294901760
  %v261 = vsub.f32 %v259, %v260
  %v262 = vand.u32 %v261, 4294901760
  %263 = vmatprep.subr.mxu0 %v262
  %v264 = vand.u32 %v37, 4294901760
  %v265 = vsub.f32 %v37, %v264
  %v266 = vand.u32 %v265, 4294901760
  %v267 = vsub.f32 %v265, %v266
  %v268 = vand.u32 %v267, 4294901760
  %269 = vmatpush1.msra.mxu0 %v268
  %v270 = vand.u32 %v36, 4294901760
  %v271 = vsub.f32 %v36, %v270
  %v272 = vand.u32 %v271, 4294901760
  %v273 = vsub.f32 %v271, %v272
  %v274 = vand.u32 %v273, 4294901760
  %275 = vmatprep.subr.mxu0 %v274
  %v276 = vand.u32 %v35, 4294901760
  %v277 = vsub.f32 %v35, %v276
  %v278 = vand.u32 %v277, 4294901760
  %v279 = vsub.f32 %v277, %v278
  %v280 = vand.u32 %v279, 4294901760
  %281 = vmatpush1.msra.mxu0 %v280
  %v282 = vand.u32 %v34, 4294901760
  %v283 = vsub.f32 %v34, %v282
  %v284 = vand.u32 %v283, 4294901760
  %v285 = vsub.f32 %v283, %v284
  %v286 = vand.u32 %v285, 4294901760
  %287 = vmatprep.subr.mxu0 %v286
  %v288 = vand.u32 %v33, 4294901760
  %v289 = vsub.f32 %v33, %v288
  %v290 = vand.u32 %v289, 4294901760
  %v291 = vsub.f32 %v289, %v290
  %v292 = vand.u32 %v291, 4294901760
  %293 = vmatpush1.msra.mxu0 %v292
  %v294 = vand.u32 %v32, 4294901760
  %v295 = vsub.f32 %v32, %v294
  %v296 = vand.u32 %v295, 4294901760
  %v297 = vsub.f32 %v295, %v296
  %v298 = vand.u32 %v297, 4294901760
  %299 = vmatprep.subr.mxu0 %v298
  %v300 = vand.u32 %v31, 4294901760
  %v301 = vsub.f32 %v31, %v300
  %v302 = vand.u32 %v301, 4294901760
  %v303 = vsub.f32 %v301, %v302
  %v304 = vand.u32 %v303, 4294901760
  %305 = vmatpush1.msra.mxu0 %v304
  %v306 = vand.u32 %v30, 4294901760
  %v307 = vsub.f32 %v30, %v306
  %v308 = vand.u32 %v307, 4294901760
  %v309 = vsub.f32 %v307, %v308
  %v310 = vand.u32 %v309, 4294901760
  %311 = vmatprep.subr.mxu0 %v310
  %v312 = vand.u32 %v29, 4294901760
  %v313 = vsub.f32 %v29, %v312
  %v314 = vand.u32 %v313, 4294901760
  %v315 = vsub.f32 %v313, %v314
  %v316 = vand.u32 %v315, 4294901760
  %317 = vmatpush1.msra.mxu0 %v316
  %v318 = vand.u32 %v28, 4294901760
  %v319 = vsub.f32 %v28, %v318
  %v320 = vand.u32 %v319, 4294901760
  %v321 = vsub.f32 %v319, %v320
  %v322 = vand.u32 %v321, 4294901760
  %323 = vmatprep.subr.mxu0 %v322
  %v324 = vand.u32 %v27, 4294901760
  %v325 = vsub.f32 %v27, %v324
  %v326 = vand.u32 %v325, 4294901760
  %v327 = vsub.f32 %v325, %v326
  %v328 = vand.u32 %v327, 4294901760
  %329 = vmatpush1.msra.mxu0 %v328
  %v330 = vand.u32 %v26, 4294901760
  %v331 = vsub.f32 %v26, %v330
  %v332 = vand.u32 %v331, 4294901760
  %v333 = vsub.f32 %v331, %v332
  %v334 = vand.u32 %v333, 4294901760
  %335 = vmatprep.subr.mxu0 %v334
  %v336 = vand.u32 %v25, 4294901760
  %v337 = vsub.f32 %v25, %v336
  %v338 = vand.u32 %v337, 4294901760
  %v339 = vsub.f32 %v337, %v338
  %v340 = vand.u32 %v339, 4294901760
  %341 = vmatpush1.msra.mxu0 %v340
  %v342 = vand.u32 %v24, 4294901760
  %v343 = vsub.f32 %v24, %v342
  %v344 = vand.u32 %v343, 4294901760
  %v345 = vsub.f32 %v343, %v344
  %v346 = vand.u32 %v345, 4294901760
  %347 = vmatprep.subr.mxu0 %v346
  %v348 = vand.u32 %v23, 4294901760
  %v349 = vsub.f32 %v23, %v348
  %v350 = vand.u32 %v349, 4294901760
  %v351 = vsub.f32 %v349, %v350
  %v352 = vand.u32 %v351, 4294901760
  %353 = vmatpush1.msra.mxu0 %v352
  %v354 = vand.u32 %v22, 4294901760
  %v355 = vsub.f32 %v22, %v354
  %v356 = vand.u32 %v355, 4294901760
  %v357 = vsub.f32 %v355, %v356
  %v358 = vand.u32 %v357, 4294901760
  %359 = vmatprep.subr.mxu0 %v358
  %v360 = vand.u32 %v21, 4294901760
  %v361 = vsub.f32 %v21, %v360
  %v362 = vand.u32 %v361, 4294901760
  %v363 = vsub.f32 %v361, %v362
  %v364 = vand.u32 %v363, 4294901760
  %365 = vmatpush1.msra.mxu0 %v364
  %v366 = vand.u32 %v20, 4294901760
  %v367 = vsub.f32 %v20, %v366
  %v368 = vand.u32 %v367, 4294901760
  %v369 = vsub.f32 %v367, %v368
  %v370 = vand.u32 %v369, 4294901760
  %371 = vmatprep.subr.mxu0 %v370
  %v372 = vand.u32 %v19, 4294901760
  %v373 = vsub.f32 %v19, %v372
  %v374 = vand.u32 %v373, 4294901760
  %v375 = vsub.f32 %v373, %v374
  %v376 = vand.u32 %v375, 4294901760
  %377 = vmatpush1.msra.mxu0 %v376
  %v378 = vand.u32 %v18, 4294901760
  %v379 = vsub.f32 %v18, %v378
  %v380 = vand.u32 %v379, 4294901760
  %v381 = vsub.f32 %v379, %v380
  %v382 = vand.u32 %v381, 4294901760
  %383 = vmatprep.subr.mxu0 %v382
  %v384 = vand.u32 %v17, 4294901760
  %v385 = vsub.f32 %v17, %v384
  %v386 = vand.u32 %v385, 4294901760
  %v387 = vsub.f32 %v385, %v386
  %v388 = vand.u32 %v387, 4294901760
  %389 = vmatpush1.msra.mxu0 %v388
  %v390 = vand.u32 %v16, 4294901760
  %v391 = vsub.f32 %v16, %v390
  %v392 = vand.u32 %v391, 4294901760
  %v393 = vsub.f32 %v391, %v392
  %v394 = vand.u32 %v393, 4294901760
  %395 = vmatprep.subr.mxu0 %v394
  %v396 = vand.u32 %v15, 4294901760
  %v397 = vsub.f32 %v15, %v396
  %v398 = vand.u32 %v397, 4294901760
  %v399 = vsub.f32 %v397, %v398
  %v400 = vand.u32 %v399, 4294901760
  %401 = vmatpush1.msra.mxu0 %v400
  %v402 = vand.u32 %v14, 4294901760
  %v403 = vsub.f32 %v14, %v402
  %v404 = vand.u32 %v403, 4294901760
  %v405 = vsub.f32 %v403, %v404
  %v406 = vand.u32 %v405, 4294901760
  %407 = vmatprep.subr.mxu0 %v406
  %v408 = vand.u32 %v13, 4294901760
  %v409 = vsub.f32 %v13, %v408
  %v410 = vand.u32 %v409, 4294901760
  %v411 = vsub.f32 %v409, %v410
  %v412 = vand.u32 %v411, 4294901760
  %413 = vmatpush1.msra.mxu0 %v412
  %v414 = vand.u32 %v76, 4294901760
  %v415 = vsub.f32 %v76, %v414
  %v416 = vand.u32 %v415, 4294901760
  %v417 = vsub.f32 %v415, %v416
  %v418 = vand.u32 %v417, 4294901760
  %419 = vmatprep.subr.mxu0 %v418
  %v420 = vand.u32 %v75, 4294901760
  %v421 = vsub.f32 %v75, %v420
  %v422 = vand.u32 %v421, 4294901760
  %v423 = vsub.f32 %v421, %v422
  %v424 = vand.u32 %v423, 4294901760
  %425 = vmatpush2.msra.mxu0 %v424
  %v426 = vand.u32 %v74, 4294901760
  %v427 = vsub.f32 %v74, %v426
  %v428 = vand.u32 %v427, 4294901760
  %v429 = vsub.f32 %v427, %v428
  %v430 = vand.u32 %v429, 4294901760
  %431 = vmatprep.subr.mxu0 %v430
  %v432 = vand.u32 %v73, 4294901760
  %v433 = vsub.f32 %v73, %v432
  %v434 = vand.u32 %v433, 4294901760
  %v435 = vsub.f32 %v433, %v434
  %v436 = vand.u32 %v435, 4294901760
  %437 = vmatpush2.msra.mxu0 %v436
  %v438 = vand.u32 %v72, 4294901760
  %v439 = vsub.f32 %v72, %v438
  %v440 = vand.u32 %v439, 4294901760
  %v441 = vsub.f32 %v439, %v440
  %v442 = vand.u32 %v441, 4294901760
  %443 = vmatprep.subr.mxu0 %v442
  %v444 = vand.u32 %v71, 4294901760
  %v445 = vsub.f32 %v71, %v444
  %v446 = vand.u32 %v445, 4294901760
  %v447 = vsub.f32 %v445, %v446
  %v448 = vand.u32 %v447, 4294901760
  %449 = vmatpush2.msra.mxu0 %v448
  %v450 = vand.u32 %v70, 4294901760
  %v451 = vsub.f32 %v70, %v450
  %v452 = vand.u32 %v451, 4294901760
  %v453 = vsub.f32 %v451, %v452
  %v454 = vand.u32 %v453, 4294901760
  %455 = vmatprep.subr.mxu0 %v454
  %v456 = vand.u32 %v69, 4294901760
  %v457 = vsub.f32 %v69, %v456
  %v458 = vand.u32 %v457, 4294901760
  %v459 = vsub.f32 %v457, %v458
  %v460 = vand.u32 %v459, 4294901760
  %461 = vmatpush2.msra.mxu0 %v460
  %v462 = vand.u32 %v68, 4294901760
  %v463 = vsub.f32 %v68, %v462
  %v464 = vand.u32 %v463, 4294901760
  %v465 = vsub.f32 %v463, %v464
  %v466 = vand.u32 %v465, 4294901760
  %467 = vmatprep.subr.mxu0 %v466
  %v468 = vand.u32 %v67, 4294901760
  %v469 = vsub.f32 %v67, %v468
  %v470 = vand.u32 %v469, 4294901760
  %v471 = vsub.f32 %v469, %v470
  %v472 = vand.u32 %v471, 4294901760
  %473 = vmatpush2.msra.mxu0 %v472
  %v474 = vand.u32 %v66, 4294901760
  %v475 = vsub.f32 %v66, %v474
  %v476 = vand.u32 %v475, 4294901760
  %v477 = vsub.f32 %v475, %v476
  %v478 = vand.u32 %v477, 4294901760
  %479 = vmatprep.subr.mxu0 %v478
  %v480 = vand.u32 %v65, 4294901760
  %v481 = vsub.f32 %v65, %v480
  %v482 = vand.u32 %v481, 4294901760
  %v483 = vsub.f32 %v481, %v482
  %v484 = vand.u32 %v483, 4294901760
  %485 = vmatpush2.msra.mxu0 %v484
  %v486 = vand.u32 %v64, 4294901760
  %v487 = vsub.f32 %v64, %v486
  %v488 = vand.u32 %v487, 4294901760
  %v489 = vsub.f32 %v487, %v488
  %v490 = vand.u32 %v489, 4294901760
  %491 = vmatprep.subr.mxu0 %v490
  %v492 = vand.u32 %v63, 4294901760
  %v493 = vsub.f32 %v63, %v492
  %v494 = vand.u32 %v493, 4294901760
  %v495 = vsub.f32 %v493, %v494
  %v496 = vand.u32 %v495, 4294901760
  %497 = vmatpush2.msra.mxu0 %v496
  %v498 = vand.u32 %v62, 4294901760
  %v499 = vsub.f32 %v62, %v498
  %v500 = vand.u32 %v499, 4294901760
  %v501 = vsub.f32 %v499, %v500
  %v502 = vand.u32 %v501, 4294901760
  %503 = vmatprep.subr.mxu0 %v502
  %v504 = vand.u32 %v61, 4294901760
  %v505 = vsub.f32 %v61, %v504
  %v506 = vand.u32 %v505, 4294901760
  %v507 = vsub.f32 %v505, %v506
  %v508 = vand.u32 %v507, 4294901760
  %509 = vmatpush2.msra.mxu0 %v508
  %v510 = vand.u32 %v60, 4294901760
  %v511 = vsub.f32 %v60, %v510
  %v512 = vand.u32 %v511, 4294901760
  %v513 = vsub.f32 %v511, %v512
  %v514 = vand.u32 %v513, 4294901760
  %515 = vmatprep.subr.mxu0 %v514
  %v516 = vand.u32 %v59, 4294901760
  %v517 = vsub.f32 %v59, %v516
  %v518 = vand.u32 %v517, 4294901760
  %v519 = vsub.f32 %v517, %v518
  %v520 = vand.u32 %v519, 4294901760
  %521 = vmatpush2.msra.mxu0 %v520
  %v522 = vand.u32 %v58, 4294901760
  %v523 = vsub.f32 %v58, %v522
  %v524 = vand.u32 %v523, 4294901760
  %v525 = vsub.f32 %v523, %v524
  %v526 = vand.u32 %v525, 4294901760
  %527 = vmatprep.subr.mxu0 %v526
  %v528 = vand.u32 %v57, 4294901760
  %v529 = vsub.f32 %v57, %v528
  %v530 = vand.u32 %v529, 4294901760
  %v531 = vsub.f32 %v529, %v530
  %v532 = vand.u32 %v531, 4294901760
  %533 = vmatpush2.msra.mxu0 %v532
  %v534 = vand.u32 %v56, 4294901760
  %v535 = vsub.f32 %v56, %v534
  %v536 = vand.u32 %v535, 4294901760
  %v537 = vsub.f32 %v535, %v536
  %v538 = vand.u32 %v537, 4294901760
  %539 = vmatprep.subr.mxu0 %v538
  %v540 = vand.u32 %v55, 4294901760
  %v541 = vsub.f32 %v55, %v540
  %v542 = vand.u32 %v541, 4294901760
  %v543 = vsub.f32 %v541, %v542
  %v544 = vand.u32 %v543, 4294901760
  %545 = vmatpush2.msra.mxu0 %v544
  %v546 = vand.u32 %v54, 4294901760
  %v547 = vsub.f32 %v54, %v546
  %v548 = vand.u32 %v547, 4294901760
  %v549 = vsub.f32 %v547, %v548
  %v550 = vand.u32 %v549, 4294901760
  %551 = vmatprep.subr.mxu0 %v550
  %v552 = vand.u32 %v53, 4294901760
  %v553 = vsub.f32 %v53, %v552
  %v554 = vand.u32 %v553, 4294901760
  %v555 = vsub.f32 %v553, %v554
  %v556 = vand.u32 %v555, 4294901760
  %557 = vmatpush2.msra.mxu0 %v556
  %v558 = vand.u32 %v52, 4294901760
  %v559 = vsub.f32 %v52, %v558
  %v560 = vand.u32 %v559, 4294901760
  %v561 = vsub.f32 %v559, %v560
  %v562 = vand.u32 %v561, 4294901760
  %563 = vmatprep.subr.mxu0 %v562
  %v564 = vand.u32 %v51, 4294901760
  %v565 = vsub.f32 %v51, %v564
  %v566 = vand.u32 %v565, 4294901760
  %v567 = vsub.f32 %v565, %v566
  %v568 = vand.u32 %v567, 4294901760
  %569 = vmatpush2.msra.mxu0 %v568
  %v570 = vand.u32 %v50, 4294901760
  %v571 = vsub.f32 %v50, %v570
  %v572 = vand.u32 %v571, 4294901760
  %v573 = vsub.f32 %v571, %v572
  %v574 = vand.u32 %v573, 4294901760
  %575 = vmatprep.subr.mxu0 %v574
  %v576 = vand.u32 %v49, 4294901760
  %v577 = vsub.f32 %v49, %v576
  %v578 = vand.u32 %v577, 4294901760
  %v579 = vsub.f32 %v577, %v578
  %v580 = vand.u32 %v579, 4294901760
  %581 = vmatpush2.msra.mxu0 %v580
  %v582 = vand.u32 %v48, 4294901760
  %v583 = vsub.f32 %v48, %v582
  %v584 = vand.u32 %v583, 4294901760
  %v585 = vsub.f32 %v583, %v584
  %v586 = vand.u32 %v585, 4294901760
  %587 = vmatprep.subr.mxu0 %v586
  %v588 = vand.u32 %v47, 4294901760
  %v589 = vsub.f32 %v47, %v588
  %v590 = vand.u32 %v589, 4294901760
  %v591 = vsub.f32 %v589, %v590
  %v592 = vand.u32 %v591, 4294901760
  %593 = vmatpush2.msra.mxu0 %v592
  %v594 = vand.u32 %v46, 4294901760
  %v595 = vsub.f32 %v46, %v594
  %v596 = vand.u32 %v595, 4294901760
  %v597 = vsub.f32 %v595, %v596
  %v598 = vand.u32 %v597, 4294901760
  %599 = vmatprep.subr.mxu0 %v598
  %v600 = vand.u32 %v45, 4294901760
  %v601 = vsub.f32 %v45, %v600
  %v602 = vand.u32 %v601, 4294901760
  %v603 = vsub.f32 %v601, %v602
  %v604 = vand.u32 %v603, 4294901760
  %605 = vmatpush2.msra.mxu0 %v604
  %v606 = vand.u32 %v12, 4294901760
  %607 = vmatprep.mubr.f32.mxu0 %v606
  %v608 = vand.u32 %v11, 4294901760
  %609 = vmatmul.mubr.f32.gmra.mxu0 %v608
  %v610 = vpop.f32.mrf.mxu0
  %v611 = vadd.f32 %v218, %v610
  %v612 = vpop.f32.mrf.mxu0
  %v613 = vadd.f32 %v220, %v612
  %614 = vdwg.mxu0
  %v615 = vand.u32 %v44, 4294901760
  %v616 = vsub.f32 %v44, %v615
  %617 = vmatprep.subr.mxu0 %v616
  %v618 = vand.u32 %v43, 4294901760
  %v619 = vsub.f32 %v43, %v618
  %620 = vmatpush1.msra.mxu0 %v619
  %v621 = vand.u32 %v42, 4294901760
  %v622 = vsub.f32 %v42, %v621
  %623 = vmatprep.subr.mxu0 %v622
  %v624 = vand.u32 %v41, 4294901760
  %v625 = vsub.f32 %v41, %v624
  %626 = vmatpush1.msra.mxu0 %v625
  %v627 = vand.u32 %v40, 4294901760
  %v628 = vsub.f32 %v40, %v627
  %629 = vmatprep.subr.mxu0 %v628
  %v630 = vand.u32 %v39, 4294901760
  %v631 = vsub.f32 %v39, %v630
  %632 = vmatpush1.msra.mxu0 %v631
  %v633 = vand.u32 %v38, 4294901760
  %v634 = vsub.f32 %v38, %v633
  %635 = vmatprep.subr.mxu0 %v634
  %v636 = vand.u32 %v37, 4294901760
  %v637 = vsub.f32 %v37, %v636
  %638 = vmatpush1.msra.mxu0 %v637
  %v639 = vand.u32 %v36, 4294901760
  %v640 = vsub.f32 %v36, %v639
  %641 = vmatprep.subr.mxu0 %v640
  %v642 = vand.u32 %v35, 4294901760
  %v643 = vsub.f32 %v35, %v642
  %644 = vmatpush1.msra.mxu0 %v643
  %v645 = vand.u32 %v34, 4294901760
  %v646 = vsub.f32 %v34, %v645
  %647 = vmatprep.subr.mxu0 %v646
  %v648 = vand.u32 %v33, 4294901760
  %v649 = vsub.f32 %v33, %v648
  %650 = vmatpush1.msra.mxu0 %v649
  %v651 = vand.u32 %v32, 4294901760
  %v652 = vsub.f32 %v32, %v651
  %653 = vmatprep.subr.mxu0 %v652
  %v654 = vand.u32 %v31, 4294901760
  %v655 = vsub.f32 %v31, %v654
  %656 = vmatpush1.msra.mxu0 %v655
  %v657 = vand.u32 %v30, 4294901760
  %v658 = vsub.f32 %v30, %v657
  %659 = vmatprep.subr.mxu0 %v658
  %v660 = vand.u32 %v29, 4294901760
  %v661 = vsub.f32 %v29, %v660
  %662 = vmatpush1.msra.mxu0 %v661
  %v663 = vand.u32 %v28, 4294901760
  %v664 = vsub.f32 %v28, %v663
  %665 = vmatprep.subr.mxu0 %v664
  %v666 = vand.u32 %v27, 4294901760
  %v667 = vsub.f32 %v27, %v666
  %668 = vmatpush1.msra.mxu0 %v667
  %v669 = vand.u32 %v26, 4294901760
  %v670 = vsub.f32 %v26, %v669
  %671 = vmatprep.subr.mxu0 %v670
  %v672 = vand.u32 %v25, 4294901760
  %v673 = vsub.f32 %v25, %v672
  %674 = vmatpush1.msra.mxu0 %v673
  %v675 = vand.u32 %v24, 4294901760
  %v676 = vsub.f32 %v24, %v675
  %677 = vmatprep.subr.mxu0 %v676
  %v678 = vand.u32 %v23, 4294901760
  %v679 = vsub.f32 %v23, %v678
  %680 = vmatpush1.msra.mxu0 %v679
  %v681 = vand.u32 %v22, 4294901760
  %v682 = vsub.f32 %v22, %v681
  %683 = vmatprep.subr.mxu0 %v682
  %v684 = vand.u32 %v21, 4294901760
  %v685 = vsub.f32 %v21, %v684
  %686 = vmatpush1.msra.mxu0 %v685
  %v687 = vand.u32 %v20, 4294901760
  %v688 = vsub.f32 %v20, %v687
  %689 = vmatprep.subr.mxu0 %v688
  %v690 = vand.u32 %v19, 4294901760
  %v691 = vsub.f32 %v19, %v690
  %692 = vmatpush1.msra.mxu0 %v691
  %v693 = vand.u32 %v18, 4294901760
  %v694 = vsub.f32 %v18, %v693
  %695 = vmatprep.subr.mxu0 %v694
  %v696 = vand.u32 %v17, 4294901760
  %v697 = vsub.f32 %v17, %v696
  %698 = vmatpush1.msra.mxu0 %v697
  %v699 = vand.u32 %v16, 4294901760
  %v700 = vsub.f32 %v16, %v699
  %701 = vmatprep.subr.mxu0 %v700
  %v702 = vand.u32 %v15, 4294901760
  %v703 = vsub.f32 %v15, %v702
  %704 = vmatpush1.msra.mxu0 %v703
  %v705 = vand.u32 %v14, 4294901760
  %v706 = vsub.f32 %v14, %v705
  %707 = vmatprep.subr.mxu0 %v706
  %v708 = vand.u32 %v13, 4294901760
  %v709 = vsub.f32 %v13, %v708
  %710 = vmatpush1.msra.mxu0 %v709
  %v711 = vand.u32 %v76, 4294901760
  %v712 = vsub.f32 %v76, %v711
  %713 = vmatprep.subr.mxu0 %v712
  %v714 = vand.u32 %v75, 4294901760
  %v715 = vsub.f32 %v75, %v714
  %716 = vmatpush2.msra.mxu0 %v715
  %v717 = vand.u32 %v74, 4294901760
  %v718 = vsub.f32 %v74, %v717
  %719 = vmatprep.subr.mxu0 %v718
  %v720 = vand.u32 %v73, 4294901760
  %v721 = vsub.f32 %v73, %v720
  %722 = vmatpush2.msra.mxu0 %v721
  %v723 = vand.u32 %v72, 4294901760
  %v724 = vsub.f32 %v72, %v723
  %725 = vmatprep.subr.mxu0 %v724
  %v726 = vand.u32 %v71, 4294901760
  %v727 = vsub.f32 %v71, %v726
  %728 = vmatpush2.msra.mxu0 %v727
  %v729 = vand.u32 %v70, 4294901760
  %v730 = vsub.f32 %v70, %v729
  %731 = vmatprep.subr.mxu0 %v730
  %v732 = vand.u32 %v69, 4294901760
  %v733 = vsub.f32 %v69, %v732
  %734 = vmatpush2.msra.mxu0 %v733
  %v735 = vand.u32 %v68, 4294901760
  %v736 = vsub.f32 %v68, %v735
  %737 = vmatprep.subr.mxu0 %v736
  %v738 = vand.u32 %v67, 4294901760
  %v739 = vsub.f32 %v67, %v738
  %740 = vmatpush2.msra.mxu0 %v739
  %v741 = vand.u32 %v66, 4294901760
  %v742 = vsub.f32 %v66, %v741
  %743 = vmatprep.subr.mxu0 %v742
  %v744 = vand.u32 %v65, 4294901760
  %v745 = vsub.f32 %v65, %v744
  %746 = vmatpush2.msra.mxu0 %v745
  %v747 = vand.u32 %v64, 4294901760
  %v748 = vsub.f32 %v64, %v747
  %749 = vmatprep.subr.mxu0 %v748
  %v750 = vand.u32 %v63, 4294901760
  %v751 = vsub.f32 %v63, %v750
  %752 = vmatpush2.msra.mxu0 %v751
  %v753 = vand.u32 %v62, 4294901760
  %v754 = vsub.f32 %v62, %v753
  %755 = vmatprep.subr.mxu0 %v754
  %v756 = vand.u32 %v61, 4294901760
  %v757 = vsub.f32 %v61, %v756
  %758 = vmatpush2.msra.mxu0 %v757
  %v759 = vand.u32 %v60, 4294901760
  %v760 = vsub.f32 %v60, %v759
  %761 = vmatprep.subr.mxu0 %v760
  %v762 = vand.u32 %v59, 4294901760
  %v763 = vsub.f32 %v59, %v762
  %764 = vmatpush2.msra.mxu0 %v763
  %v765 = vand.u32 %v58, 4294901760
  %v766 = vsub.f32 %v58, %v765
  %767 = vmatprep.subr.mxu0 %v766
  %v768 = vand.u32 %v57, 4294901760
  %v769 = vsub.f32 %v57, %v768
  %770 = vmatpush2.msra.mxu0 %v769
  %v771 = vand.u32 %v56, 4294901760
  %v772 = vsub.f32 %v56, %v771
  %773 = vmatprep.subr.mxu0 %v772
  %v774 = vand.u32 %v55, 4294901760
  %v775 = vsub.f32 %v55, %v774
  %776 = vmatpush2.msra.mxu0 %v775
  %v777 = vand.u32 %v54, 4294901760
  %v778 = vsub.f32 %v54, %v777
  %779 = vmatprep.subr.mxu0 %v778
  %v780 = vand.u32 %v53, 4294901760
  %v781 = vsub.f32 %v53, %v780
  %782 = vmatpush2.msra.mxu0 %v781
  %v783 = vand.u32 %v52, 4294901760
  %v784 = vsub.f32 %v52, %v783
  %785 = vmatprep.subr.mxu0 %v784
  %v786 = vand.u32 %v51, 4294901760
  %v787 = vsub.f32 %v51, %v786
  %788 = vmatpush2.msra.mxu0 %v787
  %v789 = vand.u32 %v50, 4294901760
  %v790 = vsub.f32 %v50, %v789
  %791 = vmatprep.subr.mxu0 %v790
  %v792 = vand.u32 %v49, 4294901760
  %v793 = vsub.f32 %v49, %v792
  %794 = vmatpush2.msra.mxu0 %v793
  %v795 = vand.u32 %v48, 4294901760
  %v796 = vsub.f32 %v48, %v795
  %797 = vmatprep.subr.mxu0 %v796
  %v798 = vand.u32 %v47, 4294901760
  %v799 = vsub.f32 %v47, %v798
  %800 = vmatpush2.msra.mxu0 %v799
  %v801 = vand.u32 %v46, 4294901760
  %v802 = vsub.f32 %v46, %v801
  %803 = vmatprep.subr.mxu0 %v802
  %v804 = vand.u32 %v45, 4294901760
  %v805 = vsub.f32 %v45, %v804
  %806 = vmatpush2.msra.mxu0 %v805
  %v807 = vand.u32 %v12, 4294901760
  %v808 = vsub.f32 %v12, %v807
  %809 = vmatprep.mubr.f32.mxu0 %v808
  %v810 = vand.u32 %v11, 4294901760
  %v811 = vsub.f32 %v11, %v810
  %812 = vmatmul.mubr.f32.gmra.mxu0 %v811
  %v813 = vpop.f32.mrf.mxu0
  %v814 = vadd.f32 %v611, %v813
  %v815 = vpop.f32.mrf.mxu0
  %v816 = vadd.f32 %v613, %v815
  %817 = vdwg.mxu0
  %v818 = vand.u32 %v44, 4294901760
  %819 = vmatprep.subr.mxu0 %v818
  %v820 = vand.u32 %v43, 4294901760
  %821 = vmatpush1.msra.mxu0 %v820
  %v822 = vand.u32 %v42, 4294901760
  %823 = vmatprep.subr.mxu0 %v822
  %v824 = vand.u32 %v41, 4294901760
  %825 = vmatpush1.msra.mxu0 %v824
  %v826 = vand.u32 %v40, 4294901760
  %827 = vmatprep.subr.mxu0 %v826
  %v828 = vand.u32 %v39, 4294901760
  %829 = vmatpush1.msra.mxu0 %v828
  %v830 = vand.u32 %v38, 4294901760
  %831 = vmatprep.subr.mxu0 %v830
  %v832 = vand.u32 %v37, 4294901760
  %833 = vmatpush1.msra.mxu0 %v832
  %v834 = vand.u32 %v36, 4294901760
  %835 = vmatprep.subr.mxu0 %v834
  %v836 = vand.u32 %v35, 4294901760
  %837 = vmatpush1.msra.mxu0 %v836
  %v838 = vand.u32 %v34, 4294901760
  %839 = vmatprep.subr.mxu0 %v838
  %v840 = vand.u32 %v33, 4294901760
  %841 = vmatpush1.msra.mxu0 %v840
  %v842 = vand.u32 %v32, 4294901760
  %843 = vmatprep.subr.mxu0 %v842
  %v844 = vand.u32 %v31, 4294901760
  %845 = vmatpush1.msra.mxu0 %v844
  %v846 = vand.u32 %v30, 4294901760
  %847 = vmatprep.subr.mxu0 %v846
  %v848 = vand.u32 %v29, 4294901760
  %849 = vmatpush1.msra.mxu0 %v848
  %v850 = vand.u32 %v28, 4294901760
  %851 = vmatprep.subr.mxu0 %v850
  %v852 = vand.u32 %v27, 4294901760
  %853 = vmatpush1.msra.mxu0 %v852
  %v854 = vand.u32 %v26, 4294901760
  %855 = vmatprep.subr.mxu0 %v854
  %v856 = vand.u32 %v25, 4294901760
  %857 = vmatpush1.msra.mxu0 %v856
  %v858 = vand.u32 %v24, 4294901760
  %859 = vmatprep.subr.mxu0 %v858
  %v860 = vand.u32 %v23, 4294901760
  %861 = vmatpush1.msra.mxu0 %v860
  %v862 = vand.u32 %v22, 4294901760
  %863 = vmatprep.subr.mxu0 %v862
  %v864 = vand.u32 %v21, 4294901760
  %865 = vmatpush1.msra.mxu0 %v864
  %v866 = vand.u32 %v20, 4294901760
  %867 = vmatprep.subr.mxu0 %v866
  %v868 = vand.u32 %v19, 4294901760
  %869 = vmatpush1.msra.mxu0 %v868
  %v870 = vand.u32 %v18, 4294901760
  %871 = vmatprep.subr.mxu0 %v870
  %v872 = vand.u32 %v17, 4294901760
  %873 = vmatpush1.msra.mxu0 %v872
  %v874 = vand.u32 %v16, 4294901760
  %875 = vmatprep.subr.mxu0 %v874
  %v876 = vand.u32 %v15, 4294901760
  %877 = vmatpush1.msra.mxu0 %v876
  %v878 = vand.u32 %v14, 4294901760
  %879 = vmatprep.subr.mxu0 %v878
  %v880 = vand.u32 %v13, 4294901760
  %881 = vmatpush1.msra.mxu0 %v880
  %v882 = vand.u32 %v76, 4294901760
  %883 = vmatprep.subr.mxu0 %v882
  %v884 = vand.u32 %v75, 4294901760
  %885 = vmatpush2.msra.mxu0 %v884
  %v886 = vand.u32 %v74, 4294901760
  %887 = vmatprep.subr.mxu0 %v886
  %v888 = vand.u32 %v73, 4294901760
  %889 = vmatpush2.msra.mxu0 %v888
  %v890 = vand.u32 %v72, 4294901760
  %891 = vmatprep.subr.mxu0 %v890
  %v892 = vand.u32 %v71, 4294901760
  %893 = vmatpush2.msra.mxu0 %v892
  %v894 = vand.u32 %v70, 4294901760
  %895 = vmatprep.subr.mxu0 %v894
  %v896 = vand.u32 %v69, 4294901760
  %897 = vmatpush2.msra.mxu0 %v896
  %v898 = vand.u32 %v68, 4294901760
  %899 = vmatprep.subr.mxu0 %v898
  %v900 = vand.u32 %v67, 4294901760
  %901 = vmatpush2.msra.mxu0 %v900
  %v902 = vand.u32 %v66, 4294901760
  %903 = vmatprep.subr.mxu0 %v902
  %v904 = vand.u32 %v65, 4294901760
  %905 = vmatpush2.msra.mxu0 %v904
  %v906 = vand.u32 %v64, 4294901760
  %907 = vmatprep.subr.mxu0 %v906
  %v908 = vand.u32 %v63, 4294901760
  %909 = vmatpush2.msra.mxu0 %v908
  %v910 = vand.u32 %v62, 4294901760
  %911 = vmatprep.subr.mxu0 %v910
  %v912 = vand.u32 %v61, 4294901760
  %913 = vmatpush2.msra.mxu0 %v912
  %v914 = vand.u32 %v60, 4294901760
  %915 = vmatprep.subr.mxu0 %v914
  %v916 = vand.u32 %v59, 4294901760
  %917 = vmatpush2.msra.mxu0 %v916
  %v918 = vand.u32 %v58, 4294901760
  %919 = vmatprep.subr.mxu0 %v918
  %v920 = vand.u32 %v57, 4294901760
  %921 = vmatpush2.msra.mxu0 %v920
  %v922 = vand.u32 %v56, 4294901760
  %923 = vmatprep.subr.mxu0 %v922
  %v924 = vand.u32 %v55, 4294901760
  %925 = vmatpush2.msra.mxu0 %v924
  %v926 = vand.u32 %v54, 4294901760
  %927 = vmatprep.subr.mxu0 %v926
  %v928 = vand.u32 %v53, 4294901760
  %929 = vmatpush2.msra.mxu0 %v928
  %v930 = vand.u32 %v52, 4294901760
  %931 = vmatprep.subr.mxu0 %v930
  %v932 = vand.u32 %v51, 4294901760
  %933 = vmatpush2.msra.mxu0 %v932
  %v934 = vand.u32 %v50, 4294901760
  %935 = vmatprep.subr.mxu0 %v934
  %v936 = vand.u32 %v49, 4294901760
  %937 = vmatpush2.msra.mxu0 %v936
  %v938 = vand.u32 %v48, 4294901760
  %939 = vmatprep.subr.mxu0 %v938
  %v940 = vand.u32 %v47, 4294901760
  %941 = vmatpush2.msra.mxu0 %v940
  %v942 = vand.u32 %v46, 4294901760
  %943 = vmatprep.subr.mxu0 %v942
  %v944 = vand.u32 %v45, 4294901760
  %945 = vmatpush2.msra.mxu0 %v944
  %v946 = vand.u32 %v12, 4294901760
  %v947 = vsub.f32 %v12, %v946
  %v948 = vand.u32 %v947, 4294901760
  %949 = vmatprep.mubr.f32.mxu0 %v948
  %v950 = vand.u32 %v11, 4294901760
  %v951 = vsub.f32 %v11, %v950
  %v952 = vand.u32 %v951, 4294901760
  %953 = vmatmul.mubr.f32.gmra.mxu0 %v952
  %v954 = vpop.f32.mrf.mxu0
  %v955 = vadd.f32 %v814, %v954
  %v956 = vpop.f32.mrf.mxu0
  %v957 = vadd.f32 %v816, %v956
  %958 = vdwg.mxu0
  %v959 = vand.u32 %v44, 4294901760
  %v960 = vsub.f32 %v44, %v959
  %v961 = vand.u32 %v960, 4294901760
  %962 = vmatprep.subr.mxu0 %v961
  %v963 = vand.u32 %v43, 4294901760
  %v964 = vsub.f32 %v43, %v963
  %v965 = vand.u32 %v964, 4294901760
  %966 = vmatpush1.msra.mxu0 %v965
  %v967 = vand.u32 %v42, 4294901760
  %v968 = vsub.f32 %v42, %v967
  %v969 = vand.u32 %v968, 4294901760
  %970 = vmatprep.subr.mxu0 %v969
  %v971 = vand.u32 %v41, 4294901760
  %v972 = vsub.f32 %v41, %v971
  %v973 = vand.u32 %v972, 4294901760
  %974 = vmatpush1.msra.mxu0 %v973
  %v975 = vand.u32 %v40, 4294901760
  %v976 = vsub.f32 %v40, %v975
  %v977 = vand.u32 %v976, 4294901760
  %978 = vmatprep.subr.mxu0 %v977
  %v979 = vand.u32 %v39, 4294901760
  %v980 = vsub.f32 %v39, %v979
  %v981 = vand.u32 %v980, 4294901760
  %982 = vmatpush1.msra.mxu0 %v981
  %v983 = vand.u32 %v38, 4294901760
  %v984 = vsub.f32 %v38, %v983
  %v985 = vand.u32 %v984, 4294901760
  %986 = vmatprep.subr.mxu0 %v985
  %v987 = vand.u32 %v37, 4294901760
  %v988 = vsub.f32 %v37, %v987
  %v989 = vand.u32 %v988, 4294901760
  %990 = vmatpush1.msra.mxu0 %v989
  %v991 = vand.u32 %v36, 4294901760
  %v992 = vsub.f32 %v36, %v991
  %v993 = vand.u32 %v992, 4294901760
  %994 = vmatprep.subr.mxu0 %v993
  %v995 = vand.u32 %v35, 4294901760
  %v996 = vsub.f32 %v35, %v995
  %v997 = vand.u32 %v996, 4294901760
  %998 = vmatpush1.msra.mxu0 %v997
  %v999 = vand.u32 %v34, 4294901760
  %v1000 = vsub.f32 %v34, %v999
  %v1001 = vand.u32 %v1000, 4294901760
  %1002 = vmatprep.subr.mxu0 %v1001
  %v1003 = vand.u32 %v33, 4294901760
  %v1004 = vsub.f32 %v33, %v1003
  %v1005 = vand.u32 %v1004, 4294901760
  %1006 = vmatpush1.msra.mxu0 %v1005
  %v1007 = vand.u32 %v32, 4294901760
  %v1008 = vsub.f32 %v32, %v1007
  %v1009 = vand.u32 %v1008, 4294901760
  %1010 = vmatprep.subr.mxu0 %v1009
  %v1011 = vand.u32 %v31, 4294901760
  %v1012 = vsub.f32 %v31, %v1011
  %v1013 = vand.u32 %v1012, 4294901760
  %1014 = vmatpush1.msra.mxu0 %v1013
  %v1015 = vand.u32 %v30, 4294901760
  %v1016 = vsub.f32 %v30, %v1015
  %v1017 = vand.u32 %v1016, 4294901760
  %1018 = vmatprep.subr.mxu0 %v1017
  %v1019 = vand.u32 %v29, 4294901760
  %v1020 = vsub.f32 %v29, %v1019
  %v1021 = vand.u32 %v1020, 4294901760
  %1022 = vmatpush1.msra.mxu0 %v1021
  %v1023 = vand.u32 %v28, 4294901760
  %v1024 = vsub.f32 %v28, %v1023
  %v1025 = vand.u32 %v1024, 4294901760
  %1026 = vmatprep.subr.mxu0 %v1025
  %v1027 = vand.u32 %v27, 4294901760
  %v1028 = vsub.f32 %v27, %v1027
  %v1029 = vand.u32 %v1028, 4294901760
  %1030 = vmatpush1.msra.mxu0 %v1029
  %v1031 = vand.u32 %v26, 4294901760
  %v1032 = vsub.f32 %v26, %v1031
  %v1033 = vand.u32 %v1032, 4294901760
  %1034 = vmatprep.subr.mxu0 %v1033
  %v1035 = vand.u32 %v25, 4294901760
  %v1036 = vsub.f32 %v25, %v1035
  %v1037 = vand.u32 %v1036, 4294901760
  %1038 = vmatpush1.msra.mxu0 %v1037
  %v1039 = vand.u32 %v24, 4294901760
  %v1040 = vsub.f32 %v24, %v1039
  %v1041 = vand.u32 %v1040, 4294901760
  %1042 = vmatprep.subr.mxu0 %v1041
  %v1043 = vand.u32 %v23, 4294901760
  %v1044 = vsub.f32 %v23, %v1043
  %v1045 = vand.u32 %v1044, 4294901760
  %1046 = vmatpush1.msra.mxu0 %v1045
  %v1047 = vand.u32 %v22, 4294901760
  %v1048 = vsub.f32 %v22, %v1047
  %v1049 = vand.u32 %v1048, 4294901760
  %1050 = vmatprep.subr.mxu0 %v1049
  %v1051 = vand.u32 %v21, 4294901760
  %v1052 = vsub.f32 %v21, %v1051
  %v1053 = vand.u32 %v1052, 4294901760
  %1054 = vmatpush1.msra.mxu0 %v1053
  %v1055 = vand.u32 %v20, 4294901760
  %v1056 = vsub.f32 %v20, %v1055
  %v1057 = vand.u32 %v1056, 4294901760
  %1058 = vmatprep.subr.mxu0 %v1057
  %v1059 = vand.u32 %v19, 4294901760
  %v1060 = vsub.f32 %v19, %v1059
  %v1061 = vand.u32 %v1060, 4294901760
  %1062 = vmatpush1.msra.mxu0 %v1061
  %v1063 = vand.u32 %v18, 4294901760
  %v1064 = vsub.f32 %v18, %v1063
  %v1065 = vand.u32 %v1064, 4294901760
  %1066 = vmatprep.subr.mxu0 %v1065
  %v1067 = vand.u32 %v17, 4294901760
  %v1068 = vsub.f32 %v17, %v1067
  %v1069 = vand.u32 %v1068, 4294901760
  %1070 = vmatpush1.msra.mxu0 %v1069
  %v1071 = vand.u32 %v16, 4294901760
  %v1072 = vsub.f32 %v16, %v1071
  %v1073 = vand.u32 %v1072, 4294901760
  %1074 = vmatprep.subr.mxu0 %v1073
  %v1075 = vand.u32 %v15, 4294901760
  %v1076 = vsub.f32 %v15, %v1075
  %v1077 = vand.u32 %v1076, 4294901760
  %1078 = vmatpush1.msra.mxu0 %v1077
  %v1079 = vand.u32 %v14, 4294901760
  %v1080 = vsub.f32 %v14, %v1079
  %v1081 = vand.u32 %v1080, 4294901760
  %1082 = vmatprep.subr.mxu0 %v1081
  %v1083 = vand.u32 %v13, 4294901760
  %v1084 = vsub.f32 %v13, %v1083
  %v1085 = vand.u32 %v1084, 4294901760
  %1086 = vmatpush1.msra.mxu0 %v1085
  %v1087 = vand.u32 %v76, 4294901760
  %v1088 = vsub.f32 %v76, %v1087
  %v1089 = vand.u32 %v1088, 4294901760
  %1090 = vmatprep.subr.mxu0 %v1089
  %v1091 = vand.u32 %v75, 4294901760
  %v1092 = vsub.f32 %v75, %v1091
  %v1093 = vand.u32 %v1092, 4294901760
  %1094 = vmatpush2.msra.mxu0 %v1093
  %v1095 = vand.u32 %v74, 4294901760
  %v1096 = vsub.f32 %v74, %v1095
  %v1097 = vand.u32 %v1096, 4294901760
  %1098 = vmatprep.subr.mxu0 %v1097
  %v1099 = vand.u32 %v73, 4294901760
  %v1100 = vsub.f32 %v73, %v1099
  %v1101 = vand.u32 %v1100, 4294901760
  %1102 = vmatpush2.msra.mxu0 %v1101
  %v1103 = vand.u32 %v72, 4294901760
  %v1104 = vsub.f32 %v72, %v1103
  %v1105 = vand.u32 %v1104, 4294901760
  %1106 = vmatprep.subr.mxu0 %v1105
  %v1107 = vand.u32 %v71, 4294901760
  %v1108 = vsub.f32 %v71, %v1107
  %v1109 = vand.u32 %v1108, 4294901760
  %1110 = vmatpush2.msra.mxu0 %v1109
  %v1111 = vand.u32 %v70, 4294901760
  %v1112 = vsub.f32 %v70, %v1111
  %v1113 = vand.u32 %v1112, 4294901760
  %1114 = vmatprep.subr.mxu0 %v1113
  %v1115 = vand.u32 %v69, 4294901760
  %v1116 = vsub.f32 %v69, %v1115
  %v1117 = vand.u32 %v1116, 4294901760
  %1118 = vmatpush2.msra.mxu0 %v1117
  %v1119 = vand.u32 %v68, 4294901760
  %v1120 = vsub.f32 %v68, %v1119
  %v1121 = vand.u32 %v1120, 4294901760
  %1122 = vmatprep.subr.mxu0 %v1121
  %v1123 = vand.u32 %v67, 4294901760
  %v1124 = vsub.f32 %v67, %v1123
  %v1125 = vand.u32 %v1124, 4294901760
  %1126 = vmatpush2.msra.mxu0 %v1125
  %v1127 = vand.u32 %v66, 4294901760
  %v1128 = vsub.f32 %v66, %v1127
  %v1129 = vand.u32 %v1128, 4294901760
  %1130 = vmatprep.subr.mxu0 %v1129
  %v1131 = vand.u32 %v65, 4294901760
  %v1132 = vsub.f32 %v65, %v1131
  %v1133 = vand.u32 %v1132, 4294901760
  %1134 = vmatpush2.msra.mxu0 %v1133
  %v1135 = vand.u32 %v64, 4294901760
  %v1136 = vsub.f32 %v64, %v1135
  %v1137 = vand.u32 %v1136, 4294901760
  %1138 = vmatprep.subr.mxu0 %v1137
  %v1139 = vand.u32 %v63, 4294901760
  %v1140 = vsub.f32 %v63, %v1139
  %v1141 = vand.u32 %v1140, 4294901760
  %1142 = vmatpush2.msra.mxu0 %v1141
  %v1143 = vand.u32 %v62, 4294901760
  %v1144 = vsub.f32 %v62, %v1143
  %v1145 = vand.u32 %v1144, 4294901760
  %1146 = vmatprep.subr.mxu0 %v1145
  %v1147 = vand.u32 %v61, 4294901760
  %v1148 = vsub.f32 %v61, %v1147
  %v1149 = vand.u32 %v1148, 4294901760
  %1150 = vmatpush2.msra.mxu0 %v1149
  %v1151 = vand.u32 %v60, 4294901760
  %v1152 = vsub.f32 %v60, %v1151
  %v1153 = vand.u32 %v1152, 4294901760
  %1154 = vmatprep.subr.mxu0 %v1153
  %v1155 = vand.u32 %v59, 4294901760
  %v1156 = vsub.f32 %v59, %v1155
  %v1157 = vand.u32 %v1156, 4294901760
  %1158 = vmatpush2.msra.mxu0 %v1157
  %v1159 = vand.u32 %v58, 4294901760
  %v1160 = vsub.f32 %v58, %v1159
  %v1161 = vand.u32 %v1160, 4294901760
  %1162 = vmatprep.subr.mxu0 %v1161
  %v1163 = vand.u32 %v57, 4294901760
  %v1164 = vsub.f32 %v57, %v1163
  %v1165 = vand.u32 %v1164, 4294901760
  %1166 = vmatpush2.msra.mxu0 %v1165
  %v1167 = vand.u32 %v56, 4294901760
  %v1168 = vsub.f32 %v56, %v1167
  %v1169 = vand.u32 %v1168, 4294901760
  %1170 = vmatprep.subr.mxu0 %v1169
  %v1171 = vand.u32 %v55, 4294901760
  %v1172 = vsub.f32 %v55, %v1171
  %v1173 = vand.u32 %v1172, 4294901760
  %1174 = vmatpush2.msra.mxu0 %v1173
  %v1175 = vand.u32 %v54, 4294901760
  %v1176 = vsub.f32 %v54, %v1175
  %v1177 = vand.u32 %v1176, 4294901760
  %1178 = vmatprep.subr.mxu0 %v1177
  %v1179 = vand.u32 %v53, 4294901760
  %v1180 = vsub.f32 %v53, %v1179
  %v1181 = vand.u32 %v1180, 4294901760
  %1182 = vmatpush2.msra.mxu0 %v1181
  %v1183 = vand.u32 %v52, 4294901760
  %v1184 = vsub.f32 %v52, %v1183
  %v1185 = vand.u32 %v1184, 4294901760
  %1186 = vmatprep.subr.mxu0 %v1185
  %v1187 = vand.u32 %v51, 4294901760
  %v1188 = vsub.f32 %v51, %v1187
  %v1189 = vand.u32 %v1188, 4294901760
  %1190 = vmatpush2.msra.mxu0 %v1189
  %v1191 = vand.u32 %v50, 4294901760
  %v1192 = vsub.f32 %v50, %v1191
  %v1193 = vand.u32 %v1192, 4294901760
  %1194 = vmatprep.subr.mxu0 %v1193
  %v1195 = vand.u32 %v49, 4294901760
  %v1196 = vsub.f32 %v49, %v1195
  %v1197 = vand.u32 %v1196, 4294901760
  %1198 = vmatpush2.msra.mxu0 %v1197
  %v1199 = vand.u32 %v48, 4294901760
  %v1200 = vsub.f32 %v48, %v1199
  %v1201 = vand.u32 %v1200, 4294901760
  %1202 = vmatprep.subr.mxu0 %v1201
  %v1203 = vand.u32 %v47, 4294901760
  %v1204 = vsub.f32 %v47, %v1203
  %v1205 = vand.u32 %v1204, 4294901760
  %1206 = vmatpush2.msra.mxu0 %v1205
  %v1207 = vand.u32 %v46, 4294901760
  %v1208 = vsub.f32 %v46, %v1207
  %v1209 = vand.u32 %v1208, 4294901760
  %1210 = vmatprep.subr.mxu0 %v1209
  %v1211 = vand.u32 %v45, 4294901760
  %v1212 = vsub.f32 %v45, %v1211
  %v1213 = vand.u32 %v1212, 4294901760
  %1214 = vmatpush2.msra.mxu0 %v1213
  %v1215 = vand.u32 %v12, 4294901760
  %1216 = vmatprep.mubr.f32.mxu0 %v1215
  %v1217 = vand.u32 %v11, 4294901760
  %1218 = vmatmul.mubr.f32.gmra.mxu0 %v1217
  %v1219 = vpop.f32.mrf.mxu0
  %v1220 = vadd.f32 %v955, %v1219
  %v1221 = vpop.f32.mrf.mxu0
  %v1222 = vadd.f32 %v957, %v1221
  %1223 = vdwg.mxu0
  %v1224 = vand.u32 %v44, 4294901760
  %1225 = vmatprep.subr.mxu0 %v1224
  %v1226 = vand.u32 %v43, 4294901760
  %1227 = vmatpush1.msra.mxu0 %v1226
  %v1228 = vand.u32 %v42, 4294901760
  %1229 = vmatprep.subr.mxu0 %v1228
  %v1230 = vand.u32 %v41, 4294901760
  %1231 = vmatpush1.msra.mxu0 %v1230
  %v1232 = vand.u32 %v40, 4294901760
  %1233 = vmatprep.subr.mxu0 %v1232
  %v1234 = vand.u32 %v39, 4294901760
  %1235 = vmatpush1.msra.mxu0 %v1234
  %v1236 = vand.u32 %v38, 4294901760
  %1237 = vmatprep.subr.mxu0 %v1236
  %v1238 = vand.u32 %v37, 4294901760
  %1239 = vmatpush1.msra.mxu0 %v1238
  %v1240 = vand.u32 %v36, 4294901760
  %1241 = vmatprep.subr.mxu0 %v1240
  %v1242 = vand.u32 %v35, 4294901760
  %1243 = vmatpush1.msra.mxu0 %v1242
  %v1244 = vand.u32 %v34, 4294901760
  %1245 = vmatprep.subr.mxu0 %v1244
  %v1246 = vand.u32 %v33, 4294901760
  %1247 = vmatpush1.msra.mxu0 %v1246
  %v1248 = vand.u32 %v32, 4294901760
  %1249 = vmatprep.subr.mxu0 %v1248
  %v1250 = vand.u32 %v31, 4294901760
  %1251 = vmatpush1.msra.mxu0 %v1250
  %v1252 = vand.u32 %v30, 4294901760
  %1253 = vmatprep.subr.mxu0 %v1252
  %v1254 = vand.u32 %v29, 4294901760
  %1255 = vmatpush1.msra.mxu0 %v1254
  %v1256 = vand.u32 %v28, 4294901760
  %1257 = vmatprep.subr.mxu0 %v1256
  %v1258 = vand.u32 %v27, 4294901760
  %1259 = vmatpush1.msra.mxu0 %v1258
  %v1260 = vand.u32 %v26, 4294901760
  %1261 = vmatprep.subr.mxu0 %v1260
  %v1262 = vand.u32 %v25, 4294901760
  %1263 = vmatpush1.msra.mxu0 %v1262
  %v1264 = vand.u32 %v24, 4294901760
  %1265 = vmatprep.subr.mxu0 %v1264
  %v1266 = vand.u32 %v23, 4294901760
  %1267 = vmatpush1.msra.mxu0 %v1266
  %v1268 = vand.u32 %v22, 4294901760
  %1269 = vmatprep.subr.mxu0 %v1268
  %v1270 = vand.u32 %v21, 4294901760
  %1271 = vmatpush1.msra.mxu0 %v1270
  %v1272 = vand.u32 %v20, 4294901760
  %1273 = vmatprep.subr.mxu0 %v1272
  %v1274 = vand.u32 %v19, 4294901760
  %1275 = vmatpush1.msra.mxu0 %v1274
  %v1276 = vand.u32 %v18, 4294901760
  %1277 = vmatprep.subr.mxu0 %v1276
  %v1278 = vand.u32 %v17, 4294901760
  %1279 = vmatpush1.msra.mxu0 %v1278
  %v1280 = vand.u32 %v16, 4294901760
  %1281 = vmatprep.subr.mxu0 %v1280
  %v1282 = vand.u32 %v15, 4294901760
  %1283 = vmatpush1.msra.mxu0 %v1282
  %v1284 = vand.u32 %v14, 4294901760
  %1285 = vmatprep.subr.mxu0 %v1284
  %v1286 = vand.u32 %v13, 4294901760
  %1287 = vmatpush1.msra.mxu0 %v1286
  %v1288 = vand.u32 %v76, 4294901760
  %1289 = vmatprep.subr.mxu0 %v1288
  %v1290 = vand.u32 %v75, 4294901760
  %1291 = vmatpush2.msra.mxu0 %v1290
  %v1292 = vand.u32 %v74, 4294901760
  %1293 = vmatprep.subr.mxu0 %v1292
  %v1294 = vand.u32 %v73, 4294901760
  %1295 = vmatpush2.msra.mxu0 %v1294
  %v1296 = vand.u32 %v72, 4294901760
  %1297 = vmatprep.subr.mxu0 %v1296
  %v1298 = vand.u32 %v71, 4294901760
  %1299 = vmatpush2.msra.mxu0 %v1298
  %v1300 = vand.u32 %v70, 4294901760
  %1301 = vmatprep.subr.mxu0 %v1300
  %v1302 = vand.u32 %v69, 4294901760
  %1303 = vmatpush2.msra.mxu0 %v1302
  %v1304 = vand.u32 %v68, 4294901760
  %1305 = vmatprep.subr.mxu0 %v1304
  %v1306 = vand.u32 %v67, 4294901760
  %1307 = vmatpush2.msra.mxu0 %v1306
  %v1308 = vand.u32 %v66, 4294901760
  %1309 = vmatprep.subr.mxu0 %v1308
  %v1310 = vand.u32 %v65, 4294901760
  %1311 = vmatpush2.msra.mxu0 %v1310
  %v1312 = vand.u32 %v64, 4294901760
  %1313 = vmatprep.subr.mxu0 %v1312
  %v1314 = vand.u32 %v63, 4294901760
  %1315 = vmatpush2.msra.mxu0 %v1314
  %v1316 = vand.u32 %v62, 4294901760
  %1317 = vmatprep.subr.mxu0 %v1316
  %v1318 = vand.u32 %v61, 4294901760
  %1319 = vmatpush2.msra.mxu0 %v1318
  %v1320 = vand.u32 %v60, 4294901760
  %1321 = vmatprep.subr.mxu0 %v1320
  %v1322 = vand.u32 %v59, 4294901760
  %1323 = vmatpush2.msra.mxu0 %v1322
  %v1324 = vand.u32 %v58, 4294901760
  %1325 = vmatprep.subr.mxu0 %v1324
  %v1326 = vand.u32 %v57, 4294901760
  %1327 = vmatpush2.msra.mxu0 %v1326
  %v1328 = vand.u32 %v56, 4294901760
  %1329 = vmatprep.subr.mxu0 %v1328
  %v1330 = vand.u32 %v55, 4294901760
  %1331 = vmatpush2.msra.mxu0 %v1330
  %v1332 = vand.u32 %v54, 4294901760
  %1333 = vmatprep.subr.mxu0 %v1332
  %v1334 = vand.u32 %v53, 4294901760
  %1335 = vmatpush2.msra.mxu0 %v1334
  %v1336 = vand.u32 %v52, 4294901760
  %1337 = vmatprep.subr.mxu0 %v1336
  %v1338 = vand.u32 %v51, 4294901760
  %1339 = vmatpush2.msra.mxu0 %v1338
  %v1340 = vand.u32 %v50, 4294901760
  %1341 = vmatprep.subr.mxu0 %v1340
  %v1342 = vand.u32 %v49, 4294901760
  %1343 = vmatpush2.msra.mxu0 %v1342
  %v1344 = vand.u32 %v48, 4294901760
  %1345 = vmatprep.subr.mxu0 %v1344
  %v1346 = vand.u32 %v47, 4294901760
  %1347 = vmatpush2.msra.mxu0 %v1346
  %v1348 = vand.u32 %v46, 4294901760
  %1349 = vmatprep.subr.mxu0 %v1348
  %v1350 = vand.u32 %v45, 4294901760
  %1351 = vmatpush2.msra.mxu0 %v1350
  %v1352 = vand.u32 %v12, 4294901760
  %1353 = vmatprep.mubr.f32.mxu0 %v1352
  %v1354 = vand.u32 %v11, 4294901760
  %1355 = vmatmul.mubr.f32.gmra.mxu0 %v1354
  %v1356 = vpop.f32.mrf.mxu0
  %v1357 = vadd.f32 %v1220, %v1356
  %v1358 = vpop.f32.mrf.mxu0
  %v1359 = vadd.f32 %v1222, %v1358
  %1360 = vdwg.mxu0
  %v1361 = vsub.f32 %v11, %v1357
  %v1362 = vsub.f32 %v12, %v1359
  %1363 = vst [vmem:[%s2] sm:$0xff] %v1361
  %1364 = vst [vmem:[%s2 + $0x8] sm:$0xff] %v1362
  // Predicated region
  $region10: #{tophat_transform.1} parent=0 // pred_check
    _
  $region11: #{tophat_transform.1} parent=0 // pred_check_branch
    %1366 = sbr.rel (0) target = $region13
  $region12: #{tophat_transform.1} parent=0 // pred_region
    _
  $region13: #{tophat_transform.1} parent=0 // pred_fallthru
    _
  // Predicated region
  $region14: #{tophat_transform.1} parent=0 // pred_check
    _
  $region15: #{tophat_transform.1} parent=0 // pred_check_branch
    %1368 = sbr.rel (0) target = $region17
  $region16: #{tophat_transform.1} parent=0 // pred_region
    _
  $region17: #{tophat_transform.1} parent=0 // pred_fallthru
    _

</llo_original>
